<compile_context>
chip_gen: v6e
topology: v6e:2x2x1
jax: 0.10.0
libtpu: 0.0.40
codegen_flags: <defaults>
</compile_context>

<pallas_src>
import functools

import jax
import jax.numpy as jnp
from jax.experimental import pallas as pl
from jax.experimental.pallas import tpu as pltpu


def _make_dma_copy_kernel(num_chunks: int, chunk_rows: int):
    """Kernel copying a (rows, o) HBM ref -> HBM ref via overlapped chunk DMAs."""

    def kernel(x_hbm, o_hbm, sems):
        copies = []
        for c in range(num_chunks):  # static, unrolled
            r0 = c * chunk_rows
            cp = pltpu.make_async_copy(
                x_hbm.at[pl.ds(r0, chunk_rows)],
                o_hbm.at[pl.ds(r0, chunk_rows)],
                sems.at[c],
            )
            cp.start()
            copies.append(cp)
        for cp in copies:  # wait after all are in flight
            cp.wait()

    return kernel


def _pick_num_chunks(rows: int, row_bytes: int) -> int:
    """Largest chunk count (<= 8) that evenly divides `rows`; only split when
    the copy is big enough for DMA overlap to matter."""
    total_bytes = rows * row_bytes
    if total_bytes < (4 << 20):  # < 4 MiB: a single DMA is already overhead-free
        return 1
    for n in (8, 4, 2):
        if rows % n == 0:
            return n
    return 1


@functools.partial(jax.jit, static_argnums=(1,))
def view_forward(x: jax.Array, o: int) -> jax.Array:
    """Equivalent of torch `x.view(-1, o)`; data movement done by a Pallas DMA kernel."""
    total = x.size
    assert total % o == 0, f"cannot view {x.shape} as (-1, {o})"
    rows = total // o

    # Metadata-only row-major flatten (same semantics as torch.view on a
    # contiguous tensor); XLA lowers this to a bitcast, not a copy.
    x2d = jnp.reshape(x, (rows, o))

    row_bytes = o * x.dtype.itemsize
    num_chunks = _pick_num_chunks(rows, row_bytes)
    chunk_rows = rows // num_chunks

    return pl.pallas_call(
        _make_dma_copy_kernel(num_chunks, chunk_rows),
        out_shape=jax.ShapeDtypeStruct((rows, o), x.dtype),
        in_specs=[pl.BlockSpec(memory_space=pl.ANY)],   # leave input in HBM
        out_specs=pl.BlockSpec(memory_space=pl.ANY),    # output written in HBM by DMA
        scratch_shapes=[pltpu.SemaphoreType.DMA((num_chunks,))],
    )(x2d)


if __name__ == "__main__":
    key = jax.random.PRNGKey(0)

    # Small NCHW input consistent with a CIFAR-style conv feature map.
    N, C, H, W = 2, 4, 16, 16
    o = 256  # View(o): 2*4*16*16 = 2048 elements -> output shape (8, 256)

    x = jax.random.normal(key, (N, C, H, W), dtype=jnp.float32)

    y = view_forward(x, o)
    jax.block_until_ready(y)

    # Correctness check against plain row-major reshape (torch.view semantics).
    y_ref = jnp.reshape(x, (-1, o))
    assert y.shape == y_ref.shape == (x.size // o, o)
    assert jnp.array_equal(y, y_ref)

    print("KERNEL_OK")
</pallas_src>

<mosaic_0001>
module attributes {stable_mosaic.version = 11 : i64} {
  func.func @kernel(%arg0: memref<8x256xf32, #tpu.memory_space<any>>, %arg1: memref<8x256xf32, #tpu.memory_space<any>>, %arg2: memref<1x!tpu.dma_semaphore, #tpu.memory_space<semaphore_mem>>) attributes {dimension_semantics = [], scalar_prefetch = 0 : i64, scratch_operands = 1 : i64, tpu.core_type = #tpu.core_type<tc>} {
    %c0_i32 = arith.constant 0 : i32
    %c0_i32_0 = arith.constant 0 : i32
    %c0_i32_1 = arith.constant 0 : i32
    %0 = tpu.memref_slice %arg0[%c0_i32_0, %c0_i32_1] : memref<8x256xf32, #tpu.memory_space<any>> -> memref<8x256xf32, #tpu.memory_space<any>>
    %c0_i32_2 = arith.constant 0 : i32
    %c0_i32_3 = arith.constant 0 : i32
    %1 = tpu.memref_slice %arg1[%c0_i32_2, %c0_i32_3] : memref<8x256xf32, #tpu.memory_space<any>> -> memref<8x256xf32, #tpu.memory_space<any>>
    %2 = tpu.memref_slice %arg2[%c0_i32] : memref<1x!tpu.dma_semaphore, #tpu.memory_space<semaphore_mem>> -> memref<1x!tpu.dma_semaphore, #tpu.memory_space<semaphore_mem>>
    %3 = tpu.memref_squeeze %2 : memref<1x!tpu.dma_semaphore, #tpu.memory_space<semaphore_mem>> -> memref<!tpu.dma_semaphore, #tpu.memory_space<semaphore_mem>>
    tpu.enqueue_dma source(%0 : memref<8x256xf32, #tpu.memory_space<any>>) target(%1 : memref<8x256xf32, #tpu.memory_space<any>>) target_semaphore(%3 : memref<!tpu.dma_semaphore, #tpu.memory_space<semaphore_mem>>)
    %c0_i32_4 = arith.constant 0 : i32
    %c0_i32_5 = arith.constant 0 : i32
    %c0_i32_6 = arith.constant 0 : i32
    %4 = tpu.memref_slice %arg0[%c0_i32_5, %c0_i32_6] : memref<8x256xf32, #tpu.memory_space<any>> -> memref<8x256xf32, #tpu.memory_space<any>>
    %c0_i32_7 = arith.constant 0 : i32
    %c0_i32_8 = arith.constant 0 : i32
    %5 = tpu.memref_slice %arg1[%c0_i32_7, %c0_i32_8] : memref<8x256xf32, #tpu.memory_space<any>> -> memref<8x256xf32, #tpu.memory_space<any>>
    %6 = tpu.memref_slice %arg2[%c0_i32_4] : memref<1x!tpu.dma_semaphore, #tpu.memory_space<semaphore_mem>> -> memref<1x!tpu.dma_semaphore, #tpu.memory_space<semaphore_mem>>
    %7 = tpu.memref_squeeze %6 : memref<1x!tpu.dma_semaphore, #tpu.memory_space<semaphore_mem>> -> memref<!tpu.dma_semaphore, #tpu.memory_space<semaphore_mem>>
    tpu.wait_dma2 semaphore(%7 : memref<!tpu.dma_semaphore, #tpu.memory_space<semaphore_mem>>) src(%4 : memref<8x256xf32, #tpu.memory_space<any>>) dst(%5 : memref<8x256xf32, #tpu.memory_space<any>>)
    return
  }
}

</mosaic_0001>

<llo_original>
// kernel: view_forward.1
$region0: #{view_forward.1}
  #allocation0 [shape = 'u32[]', space=smem, size = 0x4, offset = 0x4, fixed_abs, tag = 'smem constant byte address 0x4 - core index']
  #allocation1 [shape = 'u32[144,128]{1,0:T(1,128)}', space=vmem, size = 0x12000, scoped, tag = 'internal scratch']
  #allocation2 [shape = 's32[1]{0}', space=sflag, size = 0x4, scoped, tag = 'scratch operand']
  #allocation3 [shape = 's32[]', space=sflag, size = 0x4, offset = 0, fixed_abs, tag = 'sflag constant byte address 0x0 - dummy sync flag']
  #allocation4 [shape = 's32[]', space=sflag, size = 0x4, offset = 0, fixed_abs, tag = 'sflag constant byte address 0x0 - dummy sync flag']
  #allocation5 [shape = 'u32[]', space=smem, size = 0x4, offset = 0x44, fixed_abs, tag = 'smem constant byte address 0x44 - assertion arg 0']
  #allocation6 [shape = 'u32[]', space=smem, size = 0x4, offset = 0x48, fixed_abs, tag = 'smem constant byte address 0x48 - assertion arg 1']
  %s0 = inlined_call_operand.vmem [shape: f32[8,256], index: 0, kind: input, shape index: {}]
  %s1 = inlined_call_operand.hbm [shape: f32[8,256], index: 1, kind: output, shape index: {}]
  %s2 = sld [smem:[#allocation0]]
  $region6: #{view_forward.1} parent=0
    _
  %s4 = ssub.s32 1, %s2
  %s5 = scalar_select 0, %s4, %s2
  // Predicated region
  $region2: #{view_forward.1} parent=0 // pred_check
    _
  $region3: #{view_forward.1} parent=0 // pred_check_branch
    %7 = sbr.rel target = $region5
  $region4: #{view_forward.1} parent=0 // pred_region
    %8 = sst [smem:[#allocation5]] [#allocation4]
    %9 = sst [smem:[#allocation6]] [#allocation3]
  $region5: #{view_forward.1} parent=0 // pred_fallthru
    _
  %11 = shalt.err (0)
  %s13 = sshll.u32 %s0, 4
  %s14 = int_to_ptr.vmem [resolvable:$true] %s13
  %16 = dma.vmem_to_hbm [thread:$0]  %s14, 256, %s1, [#allocation2]
  %s17 = smul.u32 8, 1
  %s18 = smul.u32 %s17, 2
  %s19 = sshll.u32 %s18, 4
  %20 = dma.done [#allocation2], %s19
  %21 = vsyncmov [#allocation2]
  %s22 = vpop.sfrf %21
  %p23 = scmp.eq.s32.totalorder %s22, 0
  %p24 = pneg %p23
  %26 = shalt.err (%p24)

</llo_original>
